<compile_context>
chip_gen: v5e
topology: v5e:2x2
jax: 0.10.0
libtpu: 0.0.40
codegen_flags: <defaults>
</compile_context>

<pallas_src>
import functools

import jax
import jax.numpy as jnp
from jax.experimental import pallas as pl
from jax.experimental.pallas import tpu as pltpu

BN_EPS = 1e-5
MOMENTUM = 0.1


def _ceil_to(v, m):
    return ((v + m - 1) // m) * m


def dsbn_kernel(x_ref, ohs_ref, oht_ref, gamma_ref, beta_ref, use_ref,
                out_ref, mean_ref, var_ref, *, eps):
    # x block: (B, TF); statistics in f32 regardless of input dtype.
    xf = x_ref[...].astype(jnp.float32)
    tf = xf.shape[-1]

    # Single-pass per-domain stats: one MXU matmul gives E[x] and E[x^2].
    #   ohs: (NDp, B) one-hot scaled by 1/count (zero rows for empty domains).
    stats = jnp.dot(ohs_ref[...],
                    jnp.concatenate([xf, xf * xf], axis=-1),
                    preferred_element_type=jnp.float32)           # (NDp, 2*TF)
    mean_d = stats[:, :tf]
    var_d = stats[:, tf:] - mean_d * mean_d                       # biased variance

    # Fold gamma/beta into per-domain affine.  Domains with count <= 1 become the
    # identity (scale=1, bias=0) so their rows pass through unchanged.
    use = use_ref[...] > 0.5                                      # (NDp, 1)
    scale_d = jax.lax.rsqrt(var_d + eps) * gamma_ref[...]         # (NDp, TF)
    bias_d = beta_ref[...] - mean_d * scale_d
    scale_d = jnp.where(use, scale_d, 1.0)
    bias_d = jnp.where(use, bias_d, 0.0)

    # One scatter matmul (raw one-hot) broadcasts each row's own-domain affine.
    sb = jnp.dot(oht_ref[...],
                 jnp.concatenate([scale_d, bias_d], axis=-1),
                 preferred_element_type=jnp.float32)              # (B, 2*TF)

    out_ref[...] = (xf * sb[:, :tf] + sb[:, tf:]).astype(out_ref.dtype)
    mean_ref[...] = mean_d
    var_ref[...] = var_d


def _vmem_estimate(batch, tf, ndp, x_bytes, out_bytes):
    """VMEM bytes for one pipelined step, accounting for (8,128) padding."""
    b8 = _ceil_to(max(batch, 1), 8)
    b128 = _ceil_to(max(batch, 1), 128)
    nd8 = _ceil_to(ndp, 8)
    blocked = (
        2 * b8 * tf * x_bytes          # x tile (double-buffered)
        + 2 * b8 * tf * out_bytes      # out tile
        + 4 * nd8 * tf * 4             # mean + var tiles
        + 4 * 8 * tf * 4               # gamma + beta (sublane-padded to 8)
        + 2 * nd8 * b128 * 4           # ohs  (lane-padded to B128)
        + 2 * b8 * 128 * 4             # oht  (NDp lane-padded to 128)
        + 2 * 8 * 128 * 4              # use flag
    )
    temps = 6 * b8 * tf * 4            # in-kernel f32 working set (x, x^2, concats, sb)
    return blocked + temps


def dsbn_forward(x, y, gamma, beta, moving_mean, moving_var, n_domain,
                 eps=BN_EPS, momentum=MOMENTUM):
    """Training-mode DSBatchNorm2 forward.

    Returns (x_norm, new_moving_mean, new_moving_var), mirroring the PyTorch module's
    returned activation plus its in-place buffer updates.
    """
    B, F = x.shape
    x_bytes = x.dtype.itemsize
    NDp = max(8, _ceil_to(n_domain, 8))

    # ---- feature-tile selection from a cross-generation VMEM budget ----
    budget = 24 << 20                      # conservative: fits v5e/v6e/v7x scoped VMEM
    tf_max = 128
    for cand in (1024, 512, 256, 128):
        if _vmem_estimate(B, cand, NDp, x_bytes, x_bytes) <= budget:
            tf_max = cand
            break

    F128 = _ceil_to(F, 128)
    if F128 <= tf_max and F128 <= 512:
        TF = F128                          # tiny feature dim: single grid step
    else:
        # keep >= 2 tiles so the "parallel" axis can shard across v7x's 2 TensorCores,
        # capped by the VMEM-derived maximum.
        TF = min(tf_max, max(128, _ceil_to((F128 + 1) // 2, 128)))
    Fp = _ceil_to(F128, TF)                # pad F UP to a multiple of TF
    n_tiles = Fp // TF

    # ---- domain one-hot helpers (tiny, built outside the kernel) ----
    dom_ids = jnp.arange(NDp, dtype=jnp.int32)
    oh = (y[None, :].astype(jnp.int32) == dom_ids[:, None]).astype(jnp.float32)  # (NDp, B)
    cnt = jnp.sum(oh, axis=1, keepdims=True)                                     # (NDp, 1)
    inv_cnt = jnp.where(cnt > 0, 1.0 / jnp.maximum(cnt, 1.0), 0.0)
    ohs = oh * inv_cnt                                                           # (NDp, B)
    oht = oh.T                                                                   # (B, NDp)
    use = (cnt > 1.5).astype(jnp.float32)                                        # (NDp, 1)

    # ---- pad feature axis (padding columns normalize to exactly 0, sliced off after) ----
    def pad_f(a):
        return jnp.pad(a, ((0, 0), (0, Fp - a.shape[1]))) if a.shape[1] != Fp else a

    x_p = pad_f(x)
    gamma_p = pad_f(jnp.asarray(gamma, jnp.float32).reshape(1, F))
    beta_p = pad_f(jnp.asarray(beta, jnp.float32).reshape(1, F))

    vmem_limit = min(_vmem_estimate(B, TF, NDp, x_bytes, x_bytes) + (8 << 20), 48 << 20)

    out_shapes = (
        jax.ShapeDtypeStruct((B, Fp), x.dtype),        # x_norm
        jax.ShapeDtypeStruct((NDp, Fp), jnp.float32),  # per-domain batch mean
        jax.ShapeDtypeStruct((NDp, Fp), jnp.float32),  # per-domain batch var (biased)
    )
    in_specs = [
        pl.BlockSpec((B, TF), lambda j: (0, j)),       # x
        pl.BlockSpec((NDp, B), lambda j: (0, 0)),      # ohs (count-normalized one-hot)
        pl.BlockSpec((B, NDp), lambda j: (0, 0)),      # oht (raw one-hot, row -> domain)
        pl.BlockSpec((1, TF), lambda j: (0, j)),       # gamma
        pl.BlockSpec((1, TF), lambda j: (0, j)),       # beta
        pl.BlockSpec((NDp, 1), lambda j: (0, 0)),      # per-domain "normalize" flag
    ]
    out_specs = (
        pl.BlockSpec((B, TF), lambda j: (0, j)),
        pl.BlockSpec((NDp, TF), lambda j: (0, j)),
        pl.BlockSpec((NDp, TF), lambda j: (0, j)),
    )

    out_p, mean_dp, var_dp = pl.pallas_call(
        functools.partial(dsbn_kernel, eps=eps),
        out_shape=out_shapes,
        grid=(n_tiles,),
        in_specs=in_specs,
        out_specs=out_specs,
        compiler_params=pltpu.CompilerParams(
            dimension_semantics=("parallel",),
            vmem_limit_bytes=int(vmem_limit),
        ),
    )(x_p, ohs, oht, gamma_p, beta_p, use)

    x_norm = out_p[:, :F]
    mean_d = mean_dp[:n_domain, :F]
    var_d = var_dp[:n_domain, :F]

    # ---- sequential moving-stat buffer update (matches the PyTorch loop order) ----
    mm = jnp.asarray(moving_mean, jnp.float32).reshape(1, F)
    mv = jnp.asarray(moving_var, jnp.float32).reshape(1, F)
    counts = cnt[:n_domain, 0]
    for i in range(n_domain):
        upd = counts[i] > 1.5
        mm = jnp.where(upd, momentum * mm + (1.0 - momentum) * mean_d[i][None, :], mm)
        mv = jnp.where(upd, momentum * mv + (1.0 - momentum) * var_d[i][None, :], mv)

    return x_norm, mm, mv


if __name__ == "__main__":
    B, F, N_DOMAIN = 16, 384, 3

    key = jax.random.PRNGKey(0)
    k_x, k_g, k_b = jax.random.split(key, 3)

    x = jax.random.normal(k_x, (B, F), jnp.float32) * 2.0 + 1.0
    # Deterministic domain labels: domain 0 -> 7 rows, domain 1 -> 8 rows, domain 2 -> 1 row
    y = jnp.array([0, 0, 0, 0, 1, 1, 1, 1, 1, 1, 0, 0, 2, 0, 1, 0], jnp.int32)

    gamma = 1.0 + 0.1 * jax.random.normal(k_g, (1, F), jnp.float32)
    beta = 0.1 * jax.random.normal(k_b, (1, F), jnp.float32)
    moving_mean = jnp.zeros((1, F), jnp.float32)
    moving_var = jnp.ones((1, F), jnp.float32)

    out, mm_new, mv_new = dsbn_forward(x, y, gamma, beta, moving_mean, moving_var, N_DOMAIN)
    jax.block_until_ready((out, mm_new, mv_new))

    # ---- pure-JAX reference (replicates the PyTorch per-domain loop, training mode) ----
    import numpy as np
    y_np = np.asarray(y)
    out_ref = jnp.zeros((B, F), jnp.float32)
    mm_ref, mv_ref = moving_mean, moving_var
    for i in range(N_DOMAIN):
        idx = np.where(y_np == i)[0]
        if len(idx) > 1:
            xi = x[idx]
            mean_i = xi.mean(axis=0)
            var_i = ((xi - mean_i) ** 2).mean(axis=0)
            x_hat = (xi - mean_i) / jnp.sqrt(var_i + BN_EPS)
            out_ref = out_ref.at[idx].set(gamma * x_hat + beta)
            mm_ref = MOMENTUM * mm_ref + (1.0 - MOMENTUM) * mean_i
            mv_ref = MOMENTUM * mv_ref + (1.0 - MOMENTUM) * var_i
        elif len(idx) == 1:
            out_ref = out_ref.at[idx].set(x[idx])

    assert jnp.allclose(out, out_ref, atol=1e-4, rtol=1e-4)
    assert jnp.allclose(mm_new, mm_ref, atol=1e-4, rtol=1e-4)
    assert jnp.allclose(mv_new, mv_ref, atol=1e-4, rtol=1e-4)

    print("KERNEL_OK")
</pallas_src>

<mosaic_0001>
module attributes {stable_mosaic.version = 11 : i64} {
  func.func @dsbn_kernel(%arg0: i32, %arg1: memref<16x384xf32, #tpu.memory_space<vmem>>, %arg2: memref<8x16xf32, #tpu.memory_space<vmem>>, %arg3: memref<16x8xf32, #tpu.memory_space<vmem>>, %arg4: memref<1x384xf32, #tpu.memory_space<vmem>>, %arg5: memref<1x384xf32, #tpu.memory_space<vmem>>, %arg6: memref<8x1xf32, #tpu.memory_space<vmem>>, %arg7: memref<16x384xf32, #tpu.memory_space<vmem>>, %arg8: memref<8x384xf32, #tpu.memory_space<vmem>>, %arg9: memref<8x384xf32, #tpu.memory_space<vmem>>) attributes {dimension_semantics = [#tpu.dimension_semantics<parallel>], iteration_bounds = array<i64: 1>, scalar_prefetch = 0 : i64, scratch_operands = 0 : i64, tpu.core_type = #tpu.core_type<tc>, window_params = [{transform_indices = @transform_0, window_bounds = array<i64: 16, 384>}, {pipeline_mode = #tpu.pipeline_mode<synchronous>, transform_indices = @transform_1, window_bounds = array<i64: 8, 16>}, {pipeline_mode = #tpu.pipeline_mode<synchronous>, transform_indices = @transform_2, window_bounds = array<i64: 16, 8>}, {transform_indices = @transform_3, window_bounds = array<i64: 1, 384>}, {transform_indices = @transform_4, window_bounds = array<i64: 1, 384>}, {pipeline_mode = #tpu.pipeline_mode<synchronous>, transform_indices = @transform_5, window_bounds = array<i64: 8, 1>}, {transform_indices = @transform_6, window_bounds = array<i64: 16, 384>}, {transform_indices = @transform_7, window_bounds = array<i64: 8, 384>}, {transform_indices = @transform_8, window_bounds = array<i64: 8, 384>}]} {
    %c0 = arith.constant 0 : index
    %c0_0 = arith.constant 0 : index
    %0 = vector.load %arg1[%c0, %c0_0] : memref<16x384xf32, #tpu.memory_space<vmem>>, vector<16x384xf32>
    %c0_1 = arith.constant 0 : index
    %c0_2 = arith.constant 0 : index
    %1 = vector.load %arg2[%c0_1, %c0_2] : memref<8x16xf32, #tpu.memory_space<vmem>>, vector<8x16xf32>
    %2 = arith.mulf %0, %0 : vector<16x384xf32>
    %3 = tpu.concatenate %0, %2 in 1 : vector<16x384xf32>, vector<16x384xf32> -> vector<16x768xf32>
    %cst = arith.constant dense<0.000000e+00> : vector<8x768xf32>
    %4 = tpu.matmul %1, %3, %cst {dimension_numbers = #tpu.dot_dimension_numbers<[1], [0], [0], [1], [0, 0, 1, 1], [], []>} : vector<8x16xf32>, vector<16x768xf32>, vector<8x768xf32> -> vector<8x768xf32>
    %5 = vector.extract_strided_slice %4 {offsets = [0, 0], sizes = [8, 384], strides = [1, 1]} : vector<8x768xf32> to vector<8x384xf32>
    %6 = vector.extract_strided_slice %4 {offsets = [0, 384], sizes = [8, 384], strides = [1, 1]} : vector<8x768xf32> to vector<8x384xf32>
    %7 = arith.mulf %5, %5 : vector<8x384xf32>
    %8 = arith.subf %6, %7 : vector<8x384xf32>
    %c0_3 = arith.constant 0 : index
    %c0_4 = arith.constant 0 : index
    %9 = vector.load %arg6[%c0_3, %c0_4] : memref<8x1xf32, #tpu.memory_space<vmem>>, vector<8x1xf32>
    %cst_5 = arith.constant 5.000000e-01 : f32
    %10 = vector.broadcast %cst_5 : f32 to vector<8x1xf32>
    %11 = arith.cmpf ogt, %9, %10 : vector<8x1xf32>
    %cst_6 = arith.constant 9.99999974E-6 : f32
    %12 = vector.broadcast %cst_6 : f32 to vector<8x384xf32>
    %13 = arith.addf %8, %12 : vector<8x384xf32>
    %14 = math.rsqrt %13 : vector<8x384xf32>
    %c0_7 = arith.constant 0 : index
    %c0_8 = arith.constant 0 : index
    %15 = vector.load %arg4[%c0_7, %c0_8] : memref<1x384xf32, #tpu.memory_space<vmem>>, vector<1x384xf32>
    %16 = vector.broadcast %15 : vector<1x384xf32> to vector<8x384xf32>
    %17 = arith.mulf %14, %16 : vector<8x384xf32>
    %c0_9 = arith.constant 0 : index
    %c0_10 = arith.constant 0 : index
    %18 = vector.load %arg5[%c0_9, %c0_10] : memref<1x384xf32, #tpu.memory_space<vmem>>, vector<1x384xf32>
    %19 = arith.mulf %5, %17 : vector<8x384xf32>
    %20 = vector.broadcast %18 : vector<1x384xf32> to vector<8x384xf32>
    %21 = arith.subf %20, %19 : vector<8x384xf32>
    %cst_11 = arith.constant 1.000000e+00 : f32
    %22 = vector.shape_cast %11 : vector<8x1xi1> to vector<8x1xi1>
    %23 = vector.broadcast %22 : vector<8x1xi1> to vector<8x384xi1>
    %24 = vector.broadcast %cst_11 : f32 to vector<8x384xf32>
    %25 = arith.select %23, %17, %24 : vector<8x384xi1>, vector<8x384xf32>
    %cst_12 = arith.constant 0.000000e+00 : f32
    %26 = vector.shape_cast %11 : vector<8x1xi1> to vector<8x1xi1>
    %27 = vector.broadcast %26 : vector<8x1xi1> to vector<8x384xi1>
    %28 = vector.broadcast %cst_12 : f32 to vector<8x384xf32>
    %29 = arith.select %27, %21, %28 : vector<8x384xi1>, vector<8x384xf32>
    %c0_13 = arith.constant 0 : index
    %c0_14 = arith.constant 0 : index
    %30 = vector.load %arg3[%c0_13, %c0_14] : memref<16x8xf32, #tpu.memory_space<vmem>>, vector<16x8xf32>
    %31 = tpu.concatenate %25, %29 in 1 : vector<8x384xf32>, vector<8x384xf32> -> vector<8x768xf32>
    %cst_15 = arith.constant dense<0.000000e+00> : vector<16x768xf32>
    %32 = tpu.matmul %30, %31, %cst_15 {dimension_numbers = #tpu.dot_dimension_numbers<[1], [0], [0], [1], [0, 0, 1, 1], [], []>} : vector<16x8xf32>, vector<8x768xf32>, vector<16x768xf32> -> vector<16x768xf32>
    %33 = vector.extract_strided_slice %32 {offsets = [0, 0], sizes = [16, 384], strides = [1, 1]} : vector<16x768xf32> to vector<16x384xf32>
    %34 = arith.mulf %0, %33 : vector<16x384xf32>
    %35 = vector.extract_strided_slice %32 {offsets = [0, 384], sizes = [16, 384], strides = [1, 1]} : vector<16x768xf32> to vector<16x384xf32>
    %36 = arith.addf %34, %35 : vector<16x384xf32>
    %c0_16 = arith.constant 0 : index
    %c0_17 = arith.constant 0 : index
    %37 = vector.load %arg7[%c0_16, %c0_17] : memref<16x384xf32, #tpu.memory_space<vmem>>, vector<16x384xf32>
    tpu.vector_store %arg7[%c0_16, %c0_17], %36 {strides = array<i32>} : memref<16x384xf32, #tpu.memory_space<vmem>>, vector<16x384xf32>,
    %c0_18 = arith.constant 0 : index
    %c0_19 = arith.constant 0 : index
    %38 = vector.load %arg8[%c0_18, %c0_19] : memref<8x384xf32, #tpu.memory_space<vmem>>, vector<8x384xf32>
    tpu.vector_store %arg8[%c0_18, %c0_19], %5 {strides = array<i32>} : memref<8x384xf32, #tpu.memory_space<vmem>>, vector<8x384xf32>,
    %c0_20 = arith.constant 0 : index
    %c0_21 = arith.constant 0 : index
    %39 = vector.load %arg9[%c0_20, %c0_21] : memref<8x384xf32, #tpu.memory_space<vmem>>, vector<8x384xf32>
    tpu.vector_store %arg9[%c0_20, %c0_21], %8 {strides = array<i32>} : memref<8x384xf32, #tpu.memory_space<vmem>>, vector<8x384xf32>,
    return
  }
  func.func @transform_0(%arg0: i32) -> (i32, i32) {
    %c0_i32 = arith.constant 0 : i32
    %c0_i32_0 = arith.constant 0 : i32
    return %c0_i32, %arg0 : i32, i32
  }
  func.func @transform_1(%arg0: i32) -> (i32, i32) {
    %c0_i32 = arith.constant 0 : i32
    %c0_i32_0 = arith.constant 0 : i32
    %c0_i32_1 = arith.constant 0 : i32
    return %c0_i32, %c0_i32_0 : i32, i32
  }
  func.func @transform_2(%arg0: i32) -> (i32, i32) {
    %c0_i32 = arith.constant 0 : i32
    %c0_i32_0 = arith.constant 0 : i32
    %c0_i32_1 = arith.constant 0 : i32
    return %c0_i32, %c0_i32_0 : i32, i32
  }
  func.func @transform_3(%arg0: i32) -> (i32, i32) {
    %c0_i32 = arith.constant 0 : i32
    %c0_i32_0 = arith.constant 0 : i32
    return %c0_i32, %arg0 : i32, i32
  }
  func.func @transform_4(%arg0: i32) -> (i32, i32) {
    %c0_i32 = arith.constant 0 : i32
    %c0_i32_0 = arith.constant 0 : i32
    return %c0_i32, %arg0 : i32, i32
  }
  func.func @transform_5(%arg0: i32) -> (i32, i32) {
    %c0_i32 = arith.constant 0 : i32
    %c0_i32_0 = arith.constant 0 : i32
    %c0_i32_1 = arith.constant 0 : i32
    return %c0_i32, %c0_i32_0 : i32, i32
  }
  func.func @transform_6(%arg0: i32) -> (i32, i32) {
    %c0_i32 = arith.constant 0 : i32
    %c0_i32_0 = arith.constant 0 : i32
    return %c0_i32, %arg0 : i32, i32
  }
  func.func @transform_7(%arg0: i32) -> (i32, i32) {
    %c0_i32 = arith.constant 0 : i32
    %c0_i32_0 = arith.constant 0 : i32
    return %c0_i32, %arg0 : i32, i32
  }
  func.func @transform_8(%arg0: i32) -> (i32, i32) {
    %c0_i32 = arith.constant 0 : i32
    %c0_i32_0 = arith.constant 0 : i32
    return %c0_i32, %arg0 : i32, i32
  }
}

</mosaic_0001>

<llo_original>
// kernel: tpu_custom_call.1
$region0: #{tpu_custom_call.1}
  #allocation0 [shape = 'u32[]', space=smem, size = 0x4, offset = 0x4, fixed_abs, tag = 'smem constant byte address 0x4 - core index']
  #allocation1 [shape = 'u32[72,128]{1,0:T(1,128)}', space=vmem, size = 0x9000, scoped, tag = 'internal scratch']
  %s0 = inlined_call_operand.hbm [shape: f32[16,384], index: 0, kind: input, shape index: {}]
  %s1 = inlined_call_operand.vmem [shape: f32[8,16], index: 1, kind: input, shape index: {}]
  %s2 = inlined_call_operand.vmem [shape: f32[16,8], index: 2, kind: input, shape index: {}]
  %s3 = inlined_call_operand.vmem [shape: f32[1,384], index: 3, kind: input, shape index: {}]
  %s4 = inlined_call_operand.vmem [shape: f32[1,384], index: 4, kind: input, shape index: {}]
  %s5 = inlined_call_operand.vmem [shape: f32[8,1], index: 5, kind: input, shape index: {}]
  %s6 = inlined_call_operand.hbm [shape: f32[16,384], index: 6, kind: output, shape index: {0}]
  %s7 = inlined_call_operand.hbm [shape: f32[8,384], index: 7, kind: output, shape index: {1}]
  %s8 = inlined_call_operand.hbm [shape: f32[8,384], index: 8, kind: output, shape index: {2}]
  %9 = xla_tuple %s6, %s7, %s8
  %s10 = sld [smem:[#allocation0]]
  $region54: #{tpu_custom_call.1} parent=0
    _
  %s12 = ssub.s32 1, %s10
  %s13 = scalar_select 0, %s12, %s10
  $region1: #{tpu_custom_call.1} parent=0
    #allocation2 [shape = 'u8[24576]{0}', space=vmem, size = 0x6000, scoped, tag = 'input window, operand 0, single buffered']
    #allocation3 [shape = 's32[1]{0}', space=sflag, size = 0x4, scoped, tag = 'scoped memory for tpu_custom_call.1']
    #allocation4 [shape = 's32[1]{0}', space=sflag, size = 0x4, scoped, tag = 'scoped memory for tpu_custom_call.1']
    #allocation5 [shape = 'u8[24576]{0}', space=vmem, size = 0x6000, scoped, tag = 'output window, operand 0, single buffered']
    #allocation6 [shape = 'u8[12288]{0}', space=vmem, size = 0x3000, scoped, tag = 'output window, operand 1, single buffered']
    #allocation7 [shape = 's32[1]{0}', space=sflag, size = 0x4, scoped, tag = 'scoped memory for tpu_custom_call.1']
    #allocation8 [shape = 'u8[12288]{0}', space=vmem, size = 0x3000, scoped, tag = 'output window, operand 2, single buffered']
    %14 = vsyncpa [#allocation3], 0
    %15 = vsyncpa [#allocation4], 0
    %16 = vsyncpa [#allocation7], 0
    // Predicated region
    $region2: #{tpu_custom_call.1} parent=1 // pred_check
      _
    $region3: #{tpu_custom_call.1} parent=1 // pred_check_branch
      %18 = sbr.rel (0) target = $region5
    $region4: #{tpu_custom_call.1} parent=1 // pred_region
      %20 = vsyncadd [#allocation3], 0
      %s21 = sshll.u32 %s0, 4
      %s22 = int_to_ptr.hbm [resolvable:$true] %s21
      %s23 = sshll.u32 [#allocation2], 4
      %s24 = int_to_ptr.vmem [resolvable:$true] %s23
      %29 = dma.hbm_to_vmem [thread:$0]  %s22, 768, %s24, [#allocation3], 384, 384, 24
    $region5: #{tpu_custom_call.1} parent=1 // pred_fallthru
      _
    // Predicated region
    $region6: #{tpu_custom_call.1} parent=1 // pred_check
      _
    $region7: #{tpu_custom_call.1} parent=1 // pred_check_branch
      %31 = sbr.rel (0) target = $region9
    $region8: #{tpu_custom_call.1} parent=1 // pred_region
      _
    $region9: #{tpu_custom_call.1} parent=1 // pred_fallthru
      _
    // Predicated region
    $region10: #{tpu_custom_call.1} parent=1 // pred_check
      _
    $region11: #{tpu_custom_call.1} parent=1 // pred_check_branch
      %33 = sbr.rel (0) target = $region13
    $region12: #{tpu_custom_call.1} parent=1 // pred_region
      _
    $region13: #{tpu_custom_call.1} parent=1 // pred_fallthru
      _
    // Predicated region
    $region14: #{tpu_custom_call.1} parent=1 // pred_check
      _
    $region15: #{tpu_custom_call.1} parent=1 // pred_check_branch
      %35 = sbr.rel (0) target = $region17
    $region16: #{tpu_custom_call.1} parent=1 // pred_region
      _
    $region17: #{tpu_custom_call.1} parent=1 // pred_fallthru
      _
    // Predicated region
    $region18: #{tpu_custom_call.1} parent=1 // pred_check
      _
    $region19: #{tpu_custom_call.1} parent=1 // pred_check_branch
      %37 = sbr.rel (0) target = $region21
    $region20: #{tpu_custom_call.1} parent=1 // pred_region
      _
    $region21: #{tpu_custom_call.1} parent=1 // pred_fallthru
      _
    // Predicated region
    $region22: #{tpu_custom_call.1} parent=1 // pred_check
      _
    $region23: #{tpu_custom_call.1} parent=1 // pred_check_branch
      %39 = sbr.rel (0) target = $region25
    $region24: #{tpu_custom_call.1} parent=1 // pred_region
      _
    $region25: #{tpu_custom_call.1} parent=1 // pred_fallthru
      _
    // Predicated region
    $region26: #{tpu_custom_call.1} parent=1 // pred_check
      _
    $region27: #{tpu_custom_call.1} parent=1 // pred_check_branch
      %41 = sbr.rel (0) target = $region29
    $region28: #{tpu_custom_call.1} parent=1 // pred_region
      %43 = dma.done [#allocation3], 768
    $region29: #{tpu_custom_call.1} parent=1 // pred_fallthru
      _
    %v44 = vld [vmem:[#allocation2] sm:$0xff]
    %v45 = vld [vmem:[#allocation2 + $0x8] sm:$0xff]
    %v46 = vld [vmem:[#allocation2 + $0x10] sm:$0xff]
    %v47 = vld [vmem:[#allocation2 + $0x18] sm:$0xff]
    %v48 = vld [vmem:[#allocation2 + $0x20] sm:$0xff]
    %v49 = vld [vmem:[#allocation2 + $0x28] sm:$0xff]
    %v50 = vld [vmem:[%s1] sm:$0xff]
    %v51 = vmul.f32 %v44, %v44
    %v52 = vmul.f32 %v45, %v45
    %v53 = vmul.f32 %v46, %v46
    %v54 = vmul.f32 %v47, %v47
    %v55 = vmul.f32 %v48, %v48
    %v56 = vmul.f32 %v49, %v49
    %vm57 = vcmask 130048
    %v59 = vsel %vm57, %v50, 0
    %61 = vmatpush.msra.mxu0 0.0
    %62 = vmatpush.msra.mxu0 0.0
    %63 = vmatpush.msra.mxu0 0.0
    %64 = vmatpush.msra.mxu0 0.0
    %65 = vmatpush.msra.mxu0 0.0
    %66 = vmatpush.msra.mxu0 0.0
    %67 = vmatpush.msra.mxu0 0.0
    %68 = vmatpush.msra.mxu0 0.0
    %69 = vmatpush.msra.mxu0 0.0
    %70 = vmatpush.msra.mxu0 0.0
    %71 = vmatpush.msra.mxu0 0.0
    %72 = vmatpush.msra.mxu0 0.0
    %73 = vmatpush.msra.mxu0 0.0
    %74 = vmatpush.msra.mxu0 0.0
    %75 = vmatpush.msra.mxu0 %v47
    %76 = vmatpush.msra.mxu0 %v44
    %77 = vmatmul.f32.gmra.mxu0 %v59
    %v78 = vpop.f32.mrf.mxu0
    %v79 = vadd.f32 0.0, %v78
    %80 = vdwg.mxu0
    %81 = vmatpush.msra.mxu0 0.0
    %82 = vmatpush.msra.mxu0 0.0
    %83 = vmatpush.msra.mxu0 0.0
    %84 = vmatpush.msra.mxu0 0.0
    %85 = vmatpush.msra.mxu0 0.0
    %86 = vmatpush.msra.mxu0 0.0
    %87 = vmatpush.msra.mxu0 0.0
    %88 = vmatpush.msra.mxu0 0.0
    %89 = vmatpush.msra.mxu0 0.0
    %90 = vmatpush.msra.mxu0 0.0
    %91 = vmatpush.msra.mxu0 0.0
    %92 = vmatpush.msra.mxu0 0.0
    %93 = vmatpush.msra.mxu0 0.0
    %94 = vmatpush.msra.mxu0 0.0
    %95 = vmatpush.msra.mxu0 %v48
    %96 = vmatpush.msra.mxu0 %v45
    %97 = vmatmul.f32.gmra.mxu0 %v59
    %v98 = vpop.f32.mrf.mxu0
    %v99 = vadd.f32 0.0, %v98
    %100 = vdwg.mxu0
    %101 = vmatpush.msra.mxu0 0.0
    %102 = vmatpush.msra.mxu0 0.0
    %103 = vmatpush.msra.mxu0 0.0
    %104 = vmatpush.msra.mxu0 0.0
    %105 = vmatpush.msra.mxu0 0.0
    %106 = vmatpush.msra.mxu0 0.0
    %107 = vmatpush.msra.mxu0 0.0
    %108 = vmatpush.msra.mxu0 0.0
    %109 = vmatpush.msra.mxu0 0.0
    %110 = vmatpush.msra.mxu0 0.0
    %111 = vmatpush.msra.mxu0 0.0
    %112 = vmatpush.msra.mxu0 0.0
    %113 = vmatpush.msra.mxu0 0.0
    %114 = vmatpush.msra.mxu0 0.0
    %115 = vmatpush.msra.mxu0 %v49
    %116 = vmatpush.msra.mxu0 %v46
    %117 = vmatmul.f32.gmra.mxu0 %v59
    %v118 = vpop.f32.mrf.mxu0
    %v119 = vadd.f32 0.0, %v118
    %120 = vdwg.mxu0
    %121 = vmatpush.msra.mxu0 0.0
    %122 = vmatpush.msra.mxu0 0.0
    %123 = vmatpush.msra.mxu0 0.0
    %124 = vmatpush.msra.mxu0 0.0
    %125 = vmatpush.msra.mxu0 0.0
    %126 = vmatpush.msra.mxu0 0.0
    %127 = vmatpush.msra.mxu0 0.0
    %128 = vmatpush.msra.mxu0 0.0
    %129 = vmatpush.msra.mxu0 0.0
    %130 = vmatpush.msra.mxu0 0.0
    %131 = vmatpush.msra.mxu0 0.0
    %132 = vmatpush.msra.mxu0 0.0
    %133 = vmatpush.msra.mxu0 0.0
    %134 = vmatpush.msra.mxu0 0.0
    %135 = vmatpush.msra.mxu0 %v54
    %136 = vmatpush.msra.mxu0 %v51
    %137 = vmatmul.f32.gmra.mxu0 %v59
    %v138 = vpop.f32.mrf.mxu0
    %v139 = vadd.f32 0.0, %v138
    %140 = vdwg.mxu0
    %141 = vmatpush.msra.mxu0 0.0
    %142 = vmatpush.msra.mxu0 0.0
    %143 = vmatpush.msra.mxu0 0.0
    %144 = vmatpush.msra.mxu0 0.0
    %145 = vmatpush.msra.mxu0 0.0
    %146 = vmatpush.msra.mxu0 0.0
    %147 = vmatpush.msra.mxu0 0.0
    %148 = vmatpush.msra.mxu0 0.0
    %149 = vmatpush.msra.mxu0 0.0
    %150 = vmatpush.msra.mxu0 0.0
    %151 = vmatpush.msra.mxu0 0.0
    %152 = vmatpush.msra.mxu0 0.0
    %153 = vmatpush.msra.mxu0 0.0
    %154 = vmatpush.msra.mxu0 0.0
    %155 = vmatpush.msra.mxu0 %v55
    %156 = vmatpush.msra.mxu0 %v52
    %157 = vmatmul.f32.gmra.mxu0 %v59
    %v158 = vpop.f32.mrf.mxu0
    %v159 = vadd.f32 0.0, %v158
    %160 = vdwg.mxu0
    %161 = vmatpush.msra.mxu0 0.0
    %162 = vmatpush.msra.mxu0 0.0
    %163 = vmatpush.msra.mxu0 0.0
    %164 = vmatpush.msra.mxu0 0.0
    %165 = vmatpush.msra.mxu0 0.0
    %166 = vmatpush.msra.mxu0 0.0
    %167 = vmatpush.msra.mxu0 0.0
    %168 = vmatpush.msra.mxu0 0.0
    %169 = vmatpush.msra.mxu0 0.0
    %170 = vmatpush.msra.mxu0 0.0
    %171 = vmatpush.msra.mxu0 0.0
    %172 = vmatpush.msra.mxu0 0.0
    %173 = vmatpush.msra.mxu0 0.0
    %174 = vmatpush.msra.mxu0 0.0
    %175 = vmatpush.msra.mxu0 %v56
    %176 = vmatpush.msra.mxu0 %v53
    %177 = vmatmul.f32.gmra.mxu0 %v59
    %v178 = vpop.f32.mrf.mxu0
    %v179 = vadd.f32 0.0, %v178
    %180 = vdwg.mxu0
    %v181 = vmul.f32 %v79, %v79
    %v182 = vmul.f32 %v99, %v99
    %v183 = vmul.f32 %v119, %v119
    %v184 = vsub.f32 %v139, %v181
    %v185 = vsub.f32 %v159, %v182
    %v186 = vsub.f32 %v179, %v183
    %v187 = vld [vmem:[%s5] sm:$0xff]
    %vm188 = vcmp.gt.f32.partialorder %v187, 0.5
    %v189 = vadd.f32 %v184, 1e-05
    %v190 = vadd.f32 %v185, 1e-05
    %v191 = vadd.f32 %v186, 1e-05
    %v192 = vrsqrt.pop %v189
    %v193 = vmul.f32 %v192, %v189
    %v194 = vmul.f32 %v193, %v192
    %v195 = vmul.f32 0.5, %v194
    %v196 = vsub.f32 1.5, %v195
    %v197 = vmul.f32 %v192, %v196
    %vm198 = vweird.f32 %v189
    %vm199 = vweird.f32 %v192
    %vm200 = vmor %vm198, %vm199
    %v201 = vsel %vm200, %v192, %v197
    %v202 = vrsqrt.pop %v190
    %v203 = vmul.f32 %v202, %v190
    %v204 = vmul.f32 %v203, %v202
    %v205 = vmul.f32 0.5, %v204
    %v206 = vsub.f32 1.5, %v205
    %v207 = vmul.f32 %v202, %v206
    %vm208 = vweird.f32 %v190
    %vm209 = vweird.f32 %v202
    %vm210 = vmor %vm208, %vm209
    %v211 = vsel %vm210, %v202, %v207
    %v212 = vrsqrt.pop %v191
    %v213 = vmul.f32 %v212, %v191
    %v214 = vmul.f32 %v213, %v212
    %v215 = vmul.f32 0.5, %v214
    %v216 = vsub.f32 1.5, %v215
    %v217 = vmul.f32 %v212, %v216
    %vm218 = vweird.f32 %v191
    %vm219 = vweird.f32 %v212
    %vm220 = vmor %vm218, %vm219
    %v221 = vsel %vm220, %v212, %v217
    %v222 = vld [vmem:[%s3] sm:$0x7]
    %v224 = vperm.slane %v222, 0
    %v225 = vperm.slane %v222, 1
    %v226 = vperm.slane %v222, 2
    %v230 = vmul.f32 %v201, %v224
    %v231 = vmul.f32 %v211, %v225
    %v232 = vmul.f32 %v221, %v226
    %v233 = vld [vmem:[%s4] sm:$0x7]
    %v234 = vmul.f32 %v79, %v230
    %v235 = vmul.f32 %v99, %v231
    %v236 = vmul.f32 %v119, %v232
    %v238 = vperm.slane %v233, 0
    %v239 = vperm.slane %v233, 1
    %v240 = vperm.slane %v233, 2
    %v244 = vsub.f32 %v238, %v234
    %v245 = vsub.f32 %v239, %v235
    %v246 = vsub.f32 %v240, %v236
    %v247 = vsel %vm188, 1, 0
    %248 = vset.pattern.permute.xlu0 0
    %249 = vperm.xlu0 %248, %v247
    %v250 = vpop.permute.xlu0 %249
    %vm251 = vcmp.eq.s32.totalorder %v250, 1
    %v252 = vsel %vm251, %v230, 1.0
    %v253 = vsel %vm251, %v231, 1.0
    %v254 = vsel %vm251, %v232, 1.0
    %v255 = vsel %vm251, %v244, 0.0
    %v256 = vsel %vm251, %v245, 0.0
    %v257 = vsel %vm251, %v246, 0.0
    %v258 = vld [vmem:[%s2] sm:$0xff]
    %v259 = vld [vmem:[%s2 + $0x8] sm:$0xff]
    %vm260 = vcmask 64512
    %v262 = vsel %vm260, %v258, 0
    %v265 = vsel %vm260, %v259, 0
    %267 = vmatpush.msra.mxu0 0.0
    %268 = vmatpush.msra.mxu0 0.0
    %269 = vmatpush.msra.mxu0 0.0
    %270 = vmatpush.msra.mxu0 0.0
    %271 = vmatpush.msra.mxu0 0.0
    %272 = vmatpush.msra.mxu0 0.0
    %273 = vmatpush.msra.mxu0 0.0
    %274 = vmatpush.msra.mxu0 0.0
    %275 = vmatpush.msra.mxu0 0.0
    %276 = vmatpush.msra.mxu0 0.0
    %277 = vmatpush.msra.mxu0 0.0
    %278 = vmatpush.msra.mxu0 0.0
    %279 = vmatpush.msra.mxu0 0.0
    %280 = vmatpush.msra.mxu0 0.0
    %281 = vmatpush.msra.mxu0 0.0
    %282 = vmatpush.msra.mxu0 %v252
    %283 = vmatmul.f32.gmra.mxu0 %v262
    %v284 = vpop.f32.mrf.mxu0
    %v285 = vadd.f32 0.0, %v284
    %286 = vmatmul.f32.gmra.mxu0 %v265
    %v287 = vpop.f32.mrf.mxu0
    %v288 = vadd.f32 0.0, %v287
    %289 = vdwg.mxu0
    %290 = vmatpush.msra.mxu0 0.0
    %291 = vmatpush.msra.mxu0 0.0
    %292 = vmatpush.msra.mxu0 0.0
    %293 = vmatpush.msra.mxu0 0.0
    %294 = vmatpush.msra.mxu0 0.0
    %295 = vmatpush.msra.mxu0 0.0
    %296 = vmatpush.msra.mxu0 0.0
    %297 = vmatpush.msra.mxu0 0.0
    %298 = vmatpush.msra.mxu0 0.0
    %299 = vmatpush.msra.mxu0 0.0
    %300 = vmatpush.msra.mxu0 0.0
    %301 = vmatpush.msra.mxu0 0.0
    %302 = vmatpush.msra.mxu0 0.0
    %303 = vmatpush.msra.mxu0 0.0
    %304 = vmatpush.msra.mxu0 0.0
    %305 = vmatpush.msra.mxu0 %v253
    %306 = vmatmul.f32.gmra.mxu0 %v262
    %v307 = vpop.f32.mrf.mxu0
    %v308 = vadd.f32 0.0, %v307
    %309 = vmatmul.f32.gmra.mxu0 %v265
    %v310 = vpop.f32.mrf.mxu0
    %v311 = vadd.f32 0.0, %v310
    %312 = vdwg.mxu0
    %313 = vmatpush.msra.mxu0 0.0
    %314 = vmatpush.msra.mxu0 0.0
    %315 = vmatpush.msra.mxu0 0.0
    %316 = vmatpush.msra.mxu0 0.0
    %317 = vmatpush.msra.mxu0 0.0
    %318 = vmatpush.msra.mxu0 0.0
    %319 = vmatpush.msra.mxu0 0.0
    %320 = vmatpush.msra.mxu0 0.0
    %321 = vmatpush.msra.mxu0 0.0
    %322 = vmatpush.msra.mxu0 0.0
    %323 = vmatpush.msra.mxu0 0.0
    %324 = vmatpush.msra.mxu0 0.0
    %325 = vmatpush.msra.mxu0 0.0
    %326 = vmatpush.msra.mxu0 0.0
    %327 = vmatpush.msra.mxu0 0.0
    %328 = vmatpush.msra.mxu0 %v254
    %329 = vmatmul.f32.gmra.mxu0 %v262
    %v330 = vpop.f32.mrf.mxu0
    %v331 = vadd.f32 0.0, %v330
    %332 = vmatmul.f32.gmra.mxu0 %v265
    %v333 = vpop.f32.mrf.mxu0
    %v334 = vadd.f32 0.0, %v333
    %335 = vdwg.mxu0
    %336 = vmatpush.msra.mxu0 0.0
    %337 = vmatpush.msra.mxu0 0.0
    %338 = vmatpush.msra.mxu0 0.0
    %339 = vmatpush.msra.mxu0 0.0
    %340 = vmatpush.msra.mxu0 0.0
    %341 = vmatpush.msra.mxu0 0.0
    %342 = vmatpush.msra.mxu0 0.0
    %343 = vmatpush.msra.mxu0 0.0
    %344 = vmatpush.msra.mxu0 0.0
    %345 = vmatpush.msra.mxu0 0.0
    %346 = vmatpush.msra.mxu0 0.0
    %347 = vmatpush.msra.mxu0 0.0
    %348 = vmatpush.msra.mxu0 0.0
    %349 = vmatpush.msra.mxu0 0.0
    %350 = vmatpush.msra.mxu0 0.0
    %351 = vmatpush.msra.mxu0 %v255
    %352 = vmatmul.f32.gmra.mxu0 %v262
    %v353 = vpop.f32.mrf.mxu0
    %v354 = vadd.f32 0.0, %v353
    %355 = vmatmul.f32.gmra.mxu0 %v265
    %v356 = vpop.f32.mrf.mxu0
    %v357 = vadd.f32 0.0, %v356
    %358 = vdwg.mxu0
    %359 = vmatpush.msra.mxu0 0.0
    %360 = vmatpush.msra.mxu0 0.0
    %361 = vmatpush.msra.mxu0 0.0
    %362 = vmatpush.msra.mxu0 0.0
    %363 = vmatpush.msra.mxu0 0.0
    %364 = vmatpush.msra.mxu0 0.0
    %365 = vmatpush.msra.mxu0 0.0
    %366 = vmatpush.msra.mxu0 0.0
    %367 = vmatpush.msra.mxu0 0.0
    %368 = vmatpush.msra.mxu0 0.0
    %369 = vmatpush.msra.mxu0 0.0
    %370 = vmatpush.msra.mxu0 0.0
    %371 = vmatpush.msra.mxu0 0.0
    %372 = vmatpush.msra.mxu0 0.0
    %373 = vmatpush.msra.mxu0 0.0
    %374 = vmatpush.msra.mxu0 %v256
    %375 = vmatmul.f32.gmra.mxu0 %v262
    %v376 = vpop.f32.mrf.mxu0
    %v377 = vadd.f32 0.0, %v376
    %378 = vmatmul.f32.gmra.mxu0 %v265
    %v379 = vpop.f32.mrf.mxu0
    %v380 = vadd.f32 0.0, %v379
    %381 = vdwg.mxu0
    %382 = vmatpush.msra.mxu0 0.0
    %383 = vmatpush.msra.mxu0 0.0
    %384 = vmatpush.msra.mxu0 0.0
    %385 = vmatpush.msra.mxu0 0.0
    %386 = vmatpush.msra.mxu0 0.0
    %387 = vmatpush.msra.mxu0 0.0
    %388 = vmatpush.msra.mxu0 0.0
    %389 = vmatpush.msra.mxu0 0.0
    %390 = vmatpush.msra.mxu0 0.0
    %391 = vmatpush.msra.mxu0 0.0
    %392 = vmatpush.msra.mxu0 0.0
    %393 = vmatpush.msra.mxu0 0.0
    %394 = vmatpush.msra.mxu0 0.0
    %395 = vmatpush.msra.mxu0 0.0
    %396 = vmatpush.msra.mxu0 0.0
    %397 = vmatpush.msra.mxu0 %v257
    %398 = vmatmul.f32.gmra.mxu0 %v262
    %v399 = vpop.f32.mrf.mxu0
    %v400 = vadd.f32 0.0, %v399
    %401 = vmatmul.f32.gmra.mxu0 %v265
    %v402 = vpop.f32.mrf.mxu0
    %v403 = vadd.f32 0.0, %v402
    %404 = vdwg.mxu0
    %v405 = vmul.f32 %v44, %v285
    %v406 = vmul.f32 %v45, %v308
    %v407 = vmul.f32 %v46, %v331
    %v408 = vmul.f32 %v47, %v288
    %v409 = vmul.f32 %v48, %v311
    %v410 = vmul.f32 %v49, %v334
    %v411 = vadd.f32 %v405, %v354
    %v412 = vadd.f32 %v406, %v377
    %v413 = vadd.f32 %v407, %v400
    %v414 = vadd.f32 %v408, %v357
    %v415 = vadd.f32 %v409, %v380
    %v416 = vadd.f32 %v410, %v403
    %417 = vst [vmem:[#allocation5] sm:$0xff] %v411
    %418 = vst [vmem:[#allocation5 + $0x8] sm:$0xff] %v412
    %419 = vst [vmem:[#allocation5 + $0x10] sm:$0xff] %v413
    %420 = vst [vmem:[#allocation5 + $0x18] sm:$0xff] %v414
    %421 = vst [vmem:[#allocation5 + $0x20] sm:$0xff] %v415
    %422 = vst [vmem:[#allocation5 + $0x28] sm:$0xff] %v416
    %423 = vst [vmem:[#allocation6] sm:$0xff] %v79
    %424 = vst [vmem:[#allocation6 + $0x8] sm:$0xff] %v99
    %425 = vst [vmem:[#allocation6 + $0x10] sm:$0xff] %v119
    %426 = vst [vmem:[#allocation8] sm:$0xff] %v184
    %427 = vst [vmem:[#allocation8 + $0x8] sm:$0xff] %v185
    %428 = vst [vmem:[#allocation8 + $0x10] sm:$0xff] %v186
    // Predicated region
    $region30: #{tpu_custom_call.1} parent=1 // pred_check
      _
    $region31: #{tpu_custom_call.1} parent=1 // pred_check_branch
      %430 = sbr.rel (0) target = $region33
    $region32: #{tpu_custom_call.1} parent=1 // pred_region
      %432 = vsyncadd [#allocation4], 0
      %s433 = sshll.u32 [#allocation5], 4
      %s434 = int_to_ptr.vmem [resolvable:$true] %s433
      %s435 = sshll.u32 %s6, 4
      %s436 = int_to_ptr.hbm [resolvable:$true] %s435
      %441 = dma.vmem_to_hbm [thread:$0]  %s434, 768, %s436, [#allocation4], 384, 384, 24
    $region33: #{tpu_custom_call.1} parent=1 // pred_fallthru
      _
    // Predicated region
    $region34: #{tpu_custom_call.1} parent=1 // pred_check
      _
    $region35: #{tpu_custom_call.1} parent=1 // pred_check_branch
      %443 = sbr.rel (0) target = $region37
    $region36: #{tpu_custom_call.1} parent=1 // pred_region
      %445 = vsyncadd [#allocation7], 0
      %s447 = sshll.u32 [#allocation6], 4
      %s448 = int_to_ptr.vmem [resolvable:$true] %s447
      %s449 = sshll.u32 %s7, 4
      %s450 = int_to_ptr.hbm [resolvable:$true] %s449
      %452 = dma.vmem_to_hbm [thread:$0]  %s448, 384, %s450, [#allocation7]
    $region37: #{tpu_custom_call.1} parent=1 // pred_fallthru
      _
    // Predicated region
    $region38: #{tpu_custom_call.1} parent=1 // pred_check
      _
    $region39: #{tpu_custom_call.1} parent=1 // pred_check_branch
      %454 = sbr.rel (0) target = $region41
    $region40: #{tpu_custom_call.1} parent=1 // pred_region
      %456 = vsyncadd [#allocation7], 0
      %s458 = sshll.u32 [#allocation8], 4
      %s459 = int_to_ptr.vmem [resolvable:$true] %s458
      %s460 = sshll.u32 %s8, 4
      %s461 = int_to_ptr.hbm [resolvable:$true] %s460
      %463 = dma.vmem_to_hbm [thread:$0]  %s459, 384, %s461, [#allocation7]
    $region41: #{tpu_custom_call.1} parent=1 // pred_fallthru
      _
    // Predicated region
    $region42: #{tpu_custom_call.1} parent=1 // pred_check
      _
    $region43: #{tpu_custom_call.1} parent=1 // pred_check_branch
      %465 = sbr.rel (0) target = $region45
    $region44: #{tpu_custom_call.1} parent=1 // pred_region
      %467 = dma.done [#allocation4], 768
    $region45: #{tpu_custom_call.1} parent=1 // pred_fallthru
      _
    // Predicated region
    $region46: #{tpu_custom_call.1} parent=1 // pred_check
      _
    $region47: #{tpu_custom_call.1} parent=1 // pred_check_branch
      %469 = sbr.rel (0) target = $region49
    $region48: #{tpu_custom_call.1} parent=1 // pred_region
      %471 = dma.done [#allocation7], 384
    $region49: #{tpu_custom_call.1} parent=1 // pred_fallthru
      _
    // Predicated region
    $region50: #{tpu_custom_call.1} parent=1 // pred_check
      _
    $region51: #{tpu_custom_call.1} parent=1 // pred_check_branch
      %473 = sbr.rel (0) target = $region53
    $region52: #{tpu_custom_call.1} parent=1 // pred_region
      %475 = dma.done [#allocation7], 384
    $region53: #{tpu_custom_call.1} parent=1 // pred_fallthru
      _
    %476 = vsyncpa [#allocation3], 1
    %477 = vsyncpa [#allocation4], 1
    %478 = vsyncpa [#allocation7], 1

</llo_original>
